<compile_context>
chip_gen: v5e
topology: v5e:2x2
jax: 0.10.0
libtpu: 0.0.40
codegen_flags: <defaults>
</compile_context>

<pallas_src>
import functools
import math

import jax
import jax.numpy as jnp
from jax.experimental import pallas as pl
from jax.experimental.pallas import tpu as pltpu


VMEM_LIMIT_BYTES = 48 * 1024 * 1024    # safe on every generation (v7x: 64 MiB/TC)
BLOCK_VMEM_BUDGET = 36 * 1024 * 1024   # headroom for pipeline bookkeeping / spills


def tensor_gradient_kernel(x_ref, o_ref, *, l1: bool, w: int, compute_dtype):
    # x block: (TB, HWp) with each row a full flattened (H, W) plane
    # (possibly lane-padded past H*W; padded tail output is sliced off).
    x = x_ref[...].astype(compute_dtype)     # no-op when dtypes already match
    tb, hw = x.shape

    # In-kernel edge-validity masks (W is a compile-time closure constant).
    col = jax.lax.broadcasted_iota(jnp.int32, (tb, hw), 1)
    has_left = (col % w) > 0                  # j > 0 in the (H, W) plane
    has_up = col >= w                         # i > 0

    # Horizontal neighbour img[i, j-1]: lane-roll by 1; wrapped entries (j==0)
    # are zeroed so the result there is -x (matches PyTorch zero padding).
    left = jnp.where(has_left, pltpu.roll(x, shift=1, axis=1), 0)
    # Vertical neighbour img[i-1, j]: lane-roll by W; wrapped entries (i==0)
    # are zeroed so the result there is -x.
    up = jnp.where(has_up, pltpu.roll(x, shift=w, axis=1), 0)

    gx = left - x
    gy = up - x
    if l1:
        out = jnp.abs(gx) + jnp.abs(gy)
    else:
        out = jnp.sqrt(gx * gx + gy * gy)
    o_ref[...] = out.astype(o_ref.dtype)


def _pick_block_rows(batch: int, per_row_bytes: int, budget_bytes: int) -> int:
    """How many flattened planes per grid step, under an explicit VMEM budget."""
    tb = budget_bytes // max(per_row_bytes, 1)
    # Never drop below 8 sublanes (the (8,128) block rule); for planes so big
    # that 8 rows blow the budget see the TODO(synk) halo note above.
    tb = max(int(tb), 8)
    if tb >= batch:
        if batch >= 32:
            # Split into 2 balanced steps so v7x's two TensorCores both work.
            tb = (((batch + 1) // 2) + 7) // 8 * 8
        else:
            tb = batch
    else:
        tb = (tb // 8) * 8                     # clean (8, 128) sublane tiling
        steps = -(-batch // tb)
        if steps > 1 and steps % 2 == 1:
            # Prefer an even number of grid steps (v7x megacore balance).
            tb_even = ((-(-batch // (steps + 1))) + 7) // 8 * 8
            if tb_even >= 8:
                tb = tb_even
    return int(min(tb, batch))


def tensor_gradient(img: jax.Array, l1: bool = True) -> jax.Array:
    """img: (..., H, W), e.g. NCHW. Returns same shape/dtype."""
    orig_shape = img.shape
    H, W = orig_shape[-2], orig_shape[-1]
    B = int(math.prod(orig_shape[:-2])) if len(orig_shape) > 2 else 1
    HW = H * W

    # Native-dtype compute for floating inputs (bf16/f16/f32); f32 otherwise.
    compute_dtype = img.dtype if jnp.issubdtype(img.dtype, jnp.floating) else jnp.float32

    x = img.reshape(B, HW)                    # free view: (b, i, j) -> (b, i*W + j)

    # Lane-dense stores: pad the flattened lane axis to a multiple of 128 when
    # needed (no-op for the common power-of-two H*W case).
    HWp = ((HW + 127) // 128) * 128
    if HWp != HW:
        x = jnp.pad(x, ((0, 0), (0, HWp - HW)))

    isz = jnp.dtype(img.dtype).itemsize
    csz = jnp.dtype(compute_dtype).itemsize
    # VMEM accounting: double-buffered in + out, plus ~4 block-sized
    # compute-dtype temporaries (rolled neighbours, gx/gy, staged output).
    per_row_bytes = 4 * HWp * isz + 4 * HWp * csz
    tb = _pick_block_rows(B, per_row_bytes, BLOCK_VMEM_BUDGET)
    grid = (pl.cdiv(B, tb),)

    out = pl.pallas_call(
        functools.partial(tensor_gradient_kernel, l1=l1, w=W,
                          compute_dtype=compute_dtype),
        out_shape=jax.ShapeDtypeStruct((B, HWp), img.dtype),
        grid=grid,
        in_specs=[pl.BlockSpec((tb, HWp), lambda b: (b, 0))],
        out_specs=pl.BlockSpec((tb, HWp), lambda b: (b, 0)),
        compiler_params=pltpu.CompilerParams(
            dimension_semantics=("parallel",),
            vmem_limit_bytes=VMEM_LIMIT_BYTES,
        ),
        cost_estimate=pl.CostEstimate(
            flops=9 * B * HW,
            transcendentals=(0 if l1 else B * HW),
            bytes_accessed=2 * B * HWp * isz,
        ),
    )(x)

    if HWp != HW:
        out = out[:, :HW]
    return out.reshape(orig_shape)


def _reference(img: jax.Array, l1: bool = True) -> jax.Array:
    """Pure-JAX reference replicating the PyTorch F.pad / slice semantics."""
    H, W = img.shape[-2], img.shape[-1]
    l = jnp.pad(img, [(0, 0)] * (img.ndim - 1) + [(1, 0)])
    r = jnp.pad(img, [(0, 0)] * (img.ndim - 1) + [(0, 1)])
    u = jnp.pad(img, [(0, 0)] * (img.ndim - 2) + [(1, 0), (0, 0)])
    d = jnp.pad(img, [(0, 0)] * (img.ndim - 2) + [(0, 1), (0, 0)])
    gx = (l - r)[..., 0:H, 0:W]
    gy = (u - d)[..., 0:H, 0:W]
    if l1:
        return jnp.abs(gx) + jnp.abs(gy)
    return jnp.sqrt(gx * gx + gy * gy)


if __name__ == "__main__":
    key = jax.random.PRNGKey(0)
    N, C, H, W = 2, 4, 16, 16
    img = jax.random.normal(key, (N, C, H, W), dtype=jnp.float32)

    # L1 variant (module default), f32.
    out_l1 = tensor_gradient(img, l1=True)
    jax.block_until_ready(out_l1)
    ref_l1 = _reference(img, l1=True)
    assert out_l1.shape == img.shape and out_l1.dtype == img.dtype
    assert jnp.allclose(out_l1, ref_l1, atol=1e-5, rtol=1e-5)

    # L2 variant, f32.
    out_l2 = tensor_gradient(img, l1=False)
    jax.block_until_ready(out_l2)
    ref_l2 = _reference(img, l1=False)
    assert out_l2.shape == img.shape and out_l2.dtype == img.dtype
    assert jnp.allclose(out_l2, ref_l2, atol=1e-5, rtol=1e-5)

    # Non-128-multiple H*W (exercises the lane-padding fallback), f32.
    img_odd = jax.random.normal(jax.random.PRNGKey(1), (3, 5, 9, 11),
                                dtype=jnp.float32)
    out_odd = tensor_gradient(img_odd, l1=True)
    jax.block_until_ready(out_odd)
    assert jnp.allclose(out_odd, _reference(img_odd, l1=True), atol=1e-5, rtol=1e-5)

    # bf16 input (exercises the dtype-native compute path).
    img_bf = img.astype(jnp.bfloat16)
    out_bf = tensor_gradient(img_bf, l1=True)
    jax.block_until_ready(out_bf)
    ref_bf = _reference(img_bf, l1=True)
    assert out_bf.dtype == jnp.bfloat16
    assert jnp.allclose(out_bf.astype(jnp.float32), ref_bf.astype(jnp.float32),
                        atol=1e-2, rtol=1e-2)

    print("KERNEL_OK")
</pallas_src>

<mosaic_0001>
module attributes {stable_mosaic.version = 11 : i64} {
  func.func @tensor_gradient_kernel(%arg0: i32, %arg1: memref<8x256xf32, #tpu.memory_space<vmem>>, %arg2: memref<8x256xf32, #tpu.memory_space<vmem>>) attributes {dimension_semantics = [#tpu.dimension_semantics<parallel>], iteration_bounds = array<i64: 1>, scalar_prefetch = 0 : i64, scratch_operands = 0 : i64, tpu.core_type = #tpu.core_type<tc>, window_params = [{transform_indices = @transform_0, window_bounds = array<i64: 8, 256>}, {transform_indices = @transform_1, window_bounds = array<i64: 8, 256>}]} {
    %c0 = arith.constant 0 : index
    %c0_0 = arith.constant 0 : index
    %0 = vector.load %arg1[%c0, %c0_0] : memref<8x256xf32, #tpu.memory_space<vmem>>, vector<8x256xf32>
    %1 = tpu.iota {dimensions = array<i32: 1>} : vector<8x256xi32>
    %c16_i32 = arith.constant 16 : i32
    %c0_i32 = arith.constant 0 : i32
    %2 = arith.cmpi eq, %c16_i32, %c0_i32 : i32
    %c1_i32 = arith.constant 1 : i32
    %3 = arith.select %2, %c1_i32, %c16_i32 : i32
    %4 = vector.broadcast %3 : i32 to vector<8x256xi32>
    %5 = arith.remsi %1, %4 : vector<8x256xi32>
    %c0_i32_1 = arith.constant 0 : i32
    %6 = vector.broadcast %c0_i32_1 : i32 to vector<8x256xi32>
    %7 = arith.cmpi ne, %5, %6 : vector<8x256xi32>
    %c0_i32_2 = arith.constant 0 : i32
    %8 = vector.broadcast %c0_i32_2 : i32 to vector<8x256xi32>
    %9 = arith.cmpi slt, %5, %8 : vector<8x256xi32>
    %c0_i32_3 = arith.constant 0 : i32
    %10 = arith.cmpi slt, %3, %c0_i32_3 : i32
    %11 = vector.broadcast %10 : i1 to vector<8x256xi1>
    %12 = vector.broadcast %11 : vector<8x256xi1> to vector<8x256xi1>
    %13 = arith.xori %9, %12 : vector<8x256xi1>
    %14 = arith.andi %13, %7 : vector<8x256xi1>
    %15 = vector.broadcast %3 : i32 to vector<8x256xi32>
    %16 = arith.addi %5, %15 : vector<8x256xi32>
    %17 = arith.select %14, %16, %5 : vector<8x256xi1>, vector<8x256xi32>
    %c0_i32_4 = arith.constant 0 : i32
    %18 = vector.broadcast %c0_i32_4 : i32 to vector<8x256xi32>
    %19 = arith.cmpi sgt, %17, %18 : vector<8x256xi32>
    %c16_i32_5 = arith.constant 16 : i32
    %20 = vector.broadcast %c16_i32_5 : i32 to vector<8x256xi32>
    %21 = arith.cmpi sge, %1, %20 : vector<8x256xi32>
    %c1_i32_6 = arith.constant 1 : i32
    %22 = tpu.dynamic_rotate %0 by %c1_i32_6 dim 1 : vector<8x256xf32>, i32 -> vector<8x256xf32>
    %c0_i32_7 = arith.constant 0 : i32
    %23 = arith.sitofp %c0_i32_7 : i32 to f32
    %24 = vector.broadcast %23 : f32 to vector<8x256xf32>
    %25 = arith.select %19, %22, %24 : vector<8x256xi1>, vector<8x256xf32>
    %c16_i32_8 = arith.constant 16 : i32
    %26 = tpu.dynamic_rotate %0 by %c16_i32_8 dim 1 : vector<8x256xf32>, i32 -> vector<8x256xf32>
    %c0_i32_9 = arith.constant 0 : i32
    %27 = arith.sitofp %c0_i32_9 : i32 to f32
    %28 = vector.broadcast %27 : f32 to vector<8x256xf32>
    %29 = arith.select %21, %26, %28 : vector<8x256xi1>, vector<8x256xf32>
    %30 = arith.subf %25, %0 : vector<8x256xf32>
    %31 = arith.subf %29, %0 : vector<8x256xf32>
    %32 = math.absf %30 : vector<8x256xf32>
    %33 = math.absf %31 : vector<8x256xf32>
    %34 = arith.addf %32, %33 : vector<8x256xf32>
    %c0_10 = arith.constant 0 : index
    %c0_11 = arith.constant 0 : index
    %35 = vector.load %arg2[%c0_10, %c0_11] : memref<8x256xf32, #tpu.memory_space<vmem>>, vector<8x256xf32>
    tpu.vector_store %arg2[%c0_10, %c0_11], %34 {strides = array<i32>} : memref<8x256xf32, #tpu.memory_space<vmem>>, vector<8x256xf32>,
    return
  }
  func.func @transform_0(%arg0: i32) -> (i32, i32) {
    %c0_i32 = arith.constant 0 : i32
    %c0_i32_0 = arith.constant 0 : i32
    return %arg0, %c0_i32 : i32, i32
  }
  func.func @transform_1(%arg0: i32) -> (i32, i32) {
    %c0_i32 = arith.constant 0 : i32
    %c0_i32_0 = arith.constant 0 : i32
    return %arg0, %c0_i32 : i32, i32
  }
}

</mosaic_0001>

<llo_original>
// kernel: tpu_custom_call.1
$region0: #{tpu_custom_call.1}
  #allocation0 [shape = 'u32[]', space=smem, size = 0x4, offset = 0x4, fixed_abs, tag = 'smem constant byte address 0x4 - core index']
  #allocation1 [shape = 'u32[72,128]{1,0:T(1,128)}', space=vmem, size = 0x9000, scoped, tag = 'internal scratch']
  %s0 = inlined_call_operand.hbm [shape: f32[8,256], index: 0, kind: input, shape index: {}]
  %s1 = inlined_call_operand.hbm [shape: f32[8,256], index: 1, kind: output, shape index: {}]
  %s2 = sld [smem:[#allocation0]]
  $region18: #{tpu_custom_call.1} parent=0
    _
  %s4 = ssub.s32 1, %s2
  %s5 = scalar_select 0, %s4, %s2
  $region1: #{tpu_custom_call.1} parent=0
    #allocation2 [shape = 'u8[8192]{0}', space=vmem, size = 0x2000, scoped, tag = 'input window, operand 0, single buffered']
    #allocation3 [shape = 's32[1]{0}', space=sflag, size = 0x4, scoped, tag = 'scoped memory for tpu_custom_call.1']
    #allocation4 [shape = 's32[1]{0}', space=sflag, size = 0x4, scoped, tag = 'scoped memory for tpu_custom_call.1']
    #allocation5 [shape = 'u8[8192]{0}', space=vmem, size = 0x2000, scoped, tag = 'output window, operand 0, single buffered']
    %6 = vsyncpa [#allocation3], 0
    %7 = vsyncpa [#allocation4], 0
    // Predicated region
    $region2: #{tpu_custom_call.1} parent=1 // pred_check
      _
    $region3: #{tpu_custom_call.1} parent=1 // pred_check_branch
      %9 = sbr.rel (0) target = $region5
    $region4: #{tpu_custom_call.1} parent=1 // pred_region
      %11 = vsyncadd [#allocation3], 0
      %s13 = sshll.u32 %s0, 4
      %s14 = int_to_ptr.hbm [resolvable:$true] %s13
      %s15 = sshll.u32 [#allocation2], 4
      %s16 = int_to_ptr.vmem [resolvable:$true] %s15
      %18 = dma.hbm_to_vmem [thread:$0]  %s14, 256, %s16, [#allocation3]
    $region5: #{tpu_custom_call.1} parent=1 // pred_fallthru
      _
    // Predicated region
    $region6: #{tpu_custom_call.1} parent=1 // pred_check
      _
    $region7: #{tpu_custom_call.1} parent=1 // pred_check_branch
      %20 = sbr.rel (0) target = $region9
    $region8: #{tpu_custom_call.1} parent=1 // pred_region
      %22 = dma.done [#allocation3], 256
    $region9: #{tpu_custom_call.1} parent=1 // pred_fallthru
      _
    %v23 = vld [vmem:[#allocation2] sm:$0xff]
    %v24 = vld [vmem:[#allocation2 + $0x8] sm:$0xff]
    %v25 = vlaneseq
    %v26 = vand.u32 %v25, 127
    %v27 = vadd.s32 %v26, 128
    %vm28 = vcmp.lt.s32.totalorder %v26, 0
    %v29 = vsub.s32 0, %v26
    %v30 = vsel %vm28, %v29, %v26
    %v31 = vshrl.u32 %v30, 4
    %v32 = vand.u32 %v30, 15
    %v33 = vsub.s32 0, %v32
    %v34 = vsel %vm28, %v33, %v32
    %vm35 = vcmp.lt.s32.totalorder %v27, 0
    %v36 = vsub.s32 0, %v27
    %v37 = vsel %vm35, %v36, %v27
    %v38 = vshrl.u32 %v37, 4
    %v39 = vand.u32 %v37, 15
    %v40 = vsub.s32 0, %v39
    %v41 = vsel %vm35, %v40, %v39
    %vm42 = vcmp.ne.s32.totalorder %v34, 0
    %vm43 = vcmp.ne.s32.totalorder %v41, 0
    %vm44 = vcmp.lt.s32.totalorder %v34, 0
    %vm45 = vcmp.lt.s32.totalorder %v41, 0
    %vm46 = vmand %vm44, %vm42
    %vm47 = vmand %vm45, %vm43
    %v48 = vadd.s32 %v34, 16
    %v49 = vadd.s32 %v41, 16
    %v50 = vsel %vm46, %v48, %v34
    %v51 = vsel %vm47, %v49, %v41
    %vm52 = vcmp.gt.s32.totalorder %v50, 0
    %vm53 = vcmp.gt.s32.totalorder %v51, 0
    %vm54 = vcmp.ge.s32.totalorder %v26, 16
    %vm55 = vcmp.ge.s32.totalorder %v27, 16
    %56 = vrot.lane.b32.xlu0 %v23, 1
    %v57 = vpop.permute.xlu0 %56
    %58 = vrot.lane.b32.xlu0 %v24, 1
    %v59 = vpop.permute.xlu0 %58
    %vm60 = vcmp.lt.s32.totalorder %v26, 1
    %v61 = vsel %vm60, %v57, %v59
    %v62 = vsel %vm60, %v59, %v57
    %v63 = vsel %vm52, %v62, 0.0
    %v64 = vsel %vm53, %v61, 0.0
    %65 = vrot.lane.b32.xlu0 %v23, 16
    %v66 = vpop.permute.xlu0 %65
    %67 = vrot.lane.b32.xlu0 %v24, 16
    %v68 = vpop.permute.xlu0 %67
    %vm69 = vcmp.lt.s32.totalorder %v26, 16
    %v70 = vsel %vm69, %v66, %v68
    %v71 = vsel %vm69, %v68, %v66
    %v72 = vsel %vm54, %v71, 0.0
    %v73 = vsel %vm55, %v70, 0.0
    %v74 = vsub.f32 %v63, %v23
    %v75 = vsub.f32 %v64, %v24
    %v76 = vsub.f32 %v72, %v23
    %v77 = vsub.f32 %v73, %v24
    %v78 = vand.u32 2147483647, %v74
    %v79 = vand.u32 2147483647, %v75
    %v80 = vand.u32 2147483647, %v76
    %v81 = vand.u32 2147483647, %v77
    %v82 = vadd.f32 %v78, %v80
    %v83 = vadd.f32 %v79, %v81
    %84 = vst [vmem:[#allocation5] sm:$0xff] %v82
    %85 = vst [vmem:[#allocation5 + $0x8] sm:$0xff] %v83
    // Predicated region
    $region10: #{tpu_custom_call.1} parent=1 // pred_check
      _
    $region11: #{tpu_custom_call.1} parent=1 // pred_check_branch
      %87 = sbr.rel (0) target = $region13
    $region12: #{tpu_custom_call.1} parent=1 // pred_region
      %89 = vsyncadd [#allocation4], 0
      %s91 = sshll.u32 [#allocation5], 4
      %s92 = int_to_ptr.vmem [resolvable:$true] %s91
      %s93 = sshll.u32 %s1, 4
      %s94 = int_to_ptr.hbm [resolvable:$true] %s93
      %96 = dma.vmem_to_hbm [thread:$0]  %s92, 256, %s94, [#allocation4]
    $region13: #{tpu_custom_call.1} parent=1 // pred_fallthru
      _
    // Predicated region
    $region14: #{tpu_custom_call.1} parent=1 // pred_check
      _
    $region15: #{tpu_custom_call.1} parent=1 // pred_check_branch
      %98 = sbr.rel (0) target = $region17
    $region16: #{tpu_custom_call.1} parent=1 // pred_region
      %100 = dma.done [#allocation4], 256
    $region17: #{tpu_custom_call.1} parent=1 // pred_fallthru
      _
    %101 = vsyncpa [#allocation3], 1
    %102 = vsyncpa [#allocation4], 1

</llo_original>
